<compile_context>
chip_gen: v7x
topology: tpu7x:2x2x1
jax: 0.10.0
libtpu: 0.0.40
codegen_flags: <defaults>
</compile_context>

<pallas_src>
import functools

import jax
import jax.numpy as jnp
from jax.experimental import pallas as pl
from jax.experimental.pallas import tpu as pltpu


_LANE = 128    # f32 lane tile (last dim)
_SUBLANE = 8   # f32 sublane tile (second-to-last dim)


def _round_up(x: int, m: int) -> int:
    return ((x + m - 1) // m) * m


def _make_mlp_kernel(num_layers: int):
    """Pallas kernel for an MLP with `num_layers` Linear layers.

    Ref order: (x, w1, b1, w2, b2, ..., wN, bN, out).
    ReLU after every layer except the last (logits).  Weights/biases are bf16
    in VMEM; matmuls are bf16 x bf16 with f32 accumulation; bias-add / ReLU run
    on the f32 accumulator (v5e-safe: no bf16 elementwise ops).
    """

    def kernel(*refs):
        x_ref = refs[0]
        o_ref = refs[-1]
        h = x_ref[...].astype(jnp.float32)
        for i in range(num_layers):
            w_ref = refs[1 + 2 * i]
            b_ref = refs[2 + 2 * i]
            # Native bf16 MXU path, f32 accumulation.
            h = jnp.dot(h.astype(w_ref.dtype), w_ref[...],
                        preferred_element_type=jnp.float32)
            h = h + b_ref[...].astype(jnp.float32)
            if i < num_layers - 1:
                h = jnp.maximum(h, 0.0)  # ReLU on hidden layers only
        o_ref[...] = h.astype(o_ref.dtype)

    return kernel


def init_mlp_params(key, obs_dim: int, action_dim: int, hidden_dims: list[int],
                    param_dtype=jnp.bfloat16):
    """PyTorch-nn.Linear-style init (uniform +-1/sqrt(fan_in)).

    Weights are stored transposed relative to PyTorch, shape (in_dim, out_dim).
    Only *hidden* feature dims are zero-padded up to multiples of 128 lanes
    (they are resident in VMEM); the input K = obs_dim and the final
    N = action_dim are kept at their true sizes so activation/logit HBM traffic
    stays narrow.  Zero padding is numerically inert.
    """
    dims = [obs_dim] + list(hidden_dims) + [action_dim]
    padded = list(dims)
    for i in range(1, len(padded) - 1):          # pad hidden dims only
        padded[i] = _round_up(padded[i], _LANE)

    params = []
    for i in range(len(dims) - 1):
        fan_in, fan_out = dims[i], dims[i + 1]
        in_pad, out_pad = padded[i], padded[i + 1]
        key, wk, bk = jax.random.split(key, 3)
        bound = 1.0 / float(fan_in) ** 0.5
        w = jax.random.uniform(wk, (fan_in, fan_out), jnp.float32, -bound, bound)
        b = jax.random.uniform(bk, (1, fan_out), jnp.float32, -bound, bound)
        w_pad = jnp.zeros((in_pad, out_pad), jnp.float32).at[:fan_in, :fan_out].set(w)
        b_pad = jnp.zeros((1, out_pad), jnp.float32).at[:, :fan_out].set(b)
        params.append((w_pad.astype(param_dtype), b_pad.astype(param_dtype)))
    return params


@functools.partial(jax.jit, static_argnames=("action_dim", "batch_tile"))
def discrete_policy_forward(state, params_flat, *, action_dim: int, batch_tile: int = 2048):
    """Forward pass of DiscretePolicy: returns logits of shape (B, action_dim)."""
    num_layers = len(params_flat) // 2
    B, obs_dim = state.shape
    assert params_flat[0].shape[0] == obs_dim
    out_dim = params_flat[-1].shape[1]           # == action_dim (unpadded)
    assert out_dim == action_dim

    # Batch tile: multiple of 8 sublanes, no bigger than the (rounded) batch.
    tb = _round_up(min(batch_tile, _round_up(B, _SUBLANE)), _SUBLANE)
    b_pad = _round_up(B, tb)
    # v7x has 2 TensorCores: make sure the "parallel" batch axis has >= 2 steps
    # when the batch allows it, so both cores get work.
    if b_pad // tb < 2 and tb > _SUBLANE:
        tb = max(_SUBLANE, _round_up((tb + 1) // 2, _SUBLANE))
        b_pad = _round_up(B, tb)
    grid = (b_pad // tb,)

    x = state.astype(jnp.float32)
    if b_pad != B:
        # Narrow (obs_dim-wide) row pad only; padded rows produce garbage logits
        # that are sliced off below (no cross-row reductions in the kernel).
        x = jnp.pad(x, ((0, b_pad - B), (0, 0)))

    kernel = _make_mlp_kernel(num_layers)

    # State/out tiled over the batch grid; params resident (constant index_map,
    # DMA'd once and reused every grid step).
    in_specs = [pl.BlockSpec((tb, obs_dim), lambda i: (i, 0))]
    for p in params_flat:
        in_specs.append(pl.BlockSpec(p.shape, lambda i: (0, 0)))
    out_specs = pl.BlockSpec((tb, action_dim), lambda i: (i, 0))

    # VMEM budget: double-buffered activation/logit tiles + resident params +
    # intermediate f32/bf16 activations, with headroom; capped at 48 MiB so we
    # stay well inside v7x's 64 MiB physical VMEM.
    param_bytes = sum(int(p.size) * p.dtype.itemsize for p in params_flat)
    max_width = max(int(p.shape[1]) for p in params_flat)
    in_tile = 4 * tb * obs_dim
    out_tile = 4 * tb * action_dim
    inter = 4 * tb * max_width * 3
    vmem_limit = 2 * (in_tile + out_tile) + 2 * param_bytes + inter + (4 << 20)
    vmem_limit = int(max(min(vmem_limit, 48 << 20), 16 << 20))

    # Advisory cost estimate so XLA can overlap the kernel with neighbours.
    flops = 2 * b_pad * sum(int(params_flat[2 * i].shape[0]) * int(params_flat[2 * i].shape[1])
                            for i in range(num_layers))
    bytes_accessed = in_tile * grid[0] + out_tile * grid[0] + param_bytes
    cost = pl.CostEstimate(flops=flops, transcendentals=0,
                           bytes_accessed=bytes_accessed)

    out = pl.pallas_call(
        kernel,
        grid=grid,
        out_shape=jax.ShapeDtypeStruct((b_pad, action_dim), jnp.float32),
        in_specs=in_specs,
        out_specs=out_specs,
        compiler_params=pltpu.CompilerParams(
            dimension_semantics=("parallel",),
            vmem_limit_bytes=vmem_limit,
        ),
        cost_estimate=cost,
    )(x, *params_flat)

    # Drop padded batch rows; lanes are already exactly action_dim wide.
    return out[:B]


def reference_forward(state, params, action_dim: int):
    """Plain-JAX reference with the same arithmetic (bf16 MXU, f32 accumulate)."""
    h = state.astype(jnp.float32)
    for i, (w, b) in enumerate(params):
        h = jnp.dot(h.astype(w.dtype), w, preferred_element_type=jnp.float32)
        h = h + b.astype(jnp.float32)
        if i < len(params) - 1:
            h = jnp.maximum(h, 0.0)
    return h[:, :action_dim]


if __name__ == "__main__":
    # Small, deterministic example consistent with the module:
    # DiscretePolicy(obs_dim=16, action_dim=8, hidden_dims=[32, 32])
    obs_dim, action_dim, hidden_dims = 16, 8, [32, 32]
    batch = 2

    key = jax.random.PRNGKey(0)
    key, pkey, skey = jax.random.split(key, 3)

    params = init_mlp_params(pkey, obs_dim, action_dim, hidden_dims)
    params_flat = tuple(x for wb in params for x in wb)

    state = jax.random.normal(skey, (batch, obs_dim), jnp.float32)

    logits = discrete_policy_forward(state, params_flat, action_dim=action_dim)
    logits = jax.block_until_ready(logits)

    ref = reference_forward(state, params, action_dim)
    assert logits.shape == (batch, action_dim)
    assert jnp.allclose(logits, ref, atol=2e-3, rtol=2e-3), "mismatch vs reference (B=2)"

    # Larger batch exercises the multi-step batch grid + resident weights.
    key, skey2 = jax.random.split(key)
    state_big = jax.random.normal(skey2, (1000, obs_dim), jnp.float32)
    logits_big = discrete_policy_forward(
        state_big, params_flat, action_dim=action_dim, batch_tile=256)
    logits_big = jax.block_until_ready(logits_big)
    ref_big = reference_forward(state_big, params, action_dim)
    assert logits_big.shape == (1000, action_dim)
    assert jnp.allclose(logits_big, ref_big, atol=5e-3, rtol=5e-3), "mismatch vs reference (B=1000)"

    # Default (large) batch tile path with the >=2-grid-step guarantee.
    logits_def = discrete_policy_forward(state_big, params_flat, action_dim=action_dim)
    logits_def = jax.block_until_ready(logits_def)
    assert jnp.allclose(logits_def, ref_big, atol=5e-3, rtol=5e-3), "mismatch vs reference (default tile)"

    print("KERNEL_OK")
</pallas_src>

<mosaic_0001>
module attributes {stable_mosaic.version = 11 : i64} {
  func.func @kernel(%arg0: i32, %arg1: memref<8x16xf32, #tpu.memory_space<vmem>>, %arg2: memref<16x128xbf16, #tpu.memory_space<vmem>>, %arg3: memref<1x128xbf16, #tpu.memory_space<vmem>>, %arg4: memref<128x128xbf16, #tpu.memory_space<vmem>>, %arg5: memref<1x128xbf16, #tpu.memory_space<vmem>>, %arg6: memref<128x8xbf16, #tpu.memory_space<vmem>>, %arg7: memref<1x8xbf16, #tpu.memory_space<vmem>>, %arg8: memref<8x8xf32, #tpu.memory_space<vmem>>) attributes {dimension_semantics = [#tpu.dimension_semantics<parallel>], iteration_bounds = array<i64: 1>, scalar_prefetch = 0 : i64, scratch_operands = 0 : i64, tpu.core_type = #tpu.core_type<tc>, window_params = [{transform_indices = @transform_0, window_bounds = array<i64: 8, 16>}, {pipeline_mode = #tpu.pipeline_mode<synchronous>, transform_indices = @transform_1, window_bounds = array<i64: 16, 128>}, {pipeline_mode = #tpu.pipeline_mode<synchronous>, transform_indices = @transform_2, window_bounds = array<i64: 1, 128>}, {pipeline_mode = #tpu.pipeline_mode<synchronous>, transform_indices = @transform_3, window_bounds = array<i64: 128, 128>}, {pipeline_mode = #tpu.pipeline_mode<synchronous>, transform_indices = @transform_4, window_bounds = array<i64: 1, 128>}, {pipeline_mode = #tpu.pipeline_mode<synchronous>, transform_indices = @transform_5, window_bounds = array<i64: 128, 8>}, {pipeline_mode = #tpu.pipeline_mode<synchronous>, transform_indices = @transform_6, window_bounds = array<i64: 1, 8>}, {transform_indices = @transform_7, window_bounds = array<i64: 8, 8>}]} {
    %c0 = arith.constant 0 : index
    %c0_0 = arith.constant 0 : index
    %0 = vector.load %arg1[%c0, %c0_0] : memref<8x16xf32, #tpu.memory_space<vmem>>, vector<8x16xf32>
    %1 = arith.truncf %0 : vector<8x16xf32> to vector<8x16xbf16>
    %c0_1 = arith.constant 0 : index
    %c0_2 = arith.constant 0 : index
    %2 = vector.load %arg2[%c0_1, %c0_2] : memref<16x128xbf16, #tpu.memory_space<vmem>>, vector<16x128xbf16>
    %cst = arith.constant dense<0.000000e+00> : vector<8x128xf32>
    %3 = tpu.matmul %1, %2, %cst {dimension_numbers = #tpu.dot_dimension_numbers<[1], [0], [0], [1], [0, 0, 1, 1], [], []>} : vector<8x16xbf16>, vector<16x128xbf16>, vector<8x128xf32> -> vector<8x128xf32>
    %c0_3 = arith.constant 0 : index
    %c0_4 = arith.constant 0 : index
    %4 = vector.load %arg3[%c0_3, %c0_4] : memref<1x128xbf16, #tpu.memory_space<vmem>>, vector<1x128xbf16>
    %5 = arith.extf %4 : vector<1x128xbf16> to vector<1x128xf32>
    %6 = vector.broadcast %5 : vector<1x128xf32> to vector<8x128xf32>
    %7 = arith.addf %3, %6 : vector<8x128xf32>
    %cst_5 = arith.constant 0.000000e+00 : f32
    %8 = vector.broadcast %cst_5 : f32 to vector<8x128xf32>
    %9 = arith.maximumf %7, %8 : vector<8x128xf32>
    %10 = arith.truncf %9 : vector<8x128xf32> to vector<8x128xbf16>
    %c0_6 = arith.constant 0 : index
    %c0_7 = arith.constant 0 : index
    %11 = vector.load %arg4[%c0_6, %c0_7] : memref<128x128xbf16, #tpu.memory_space<vmem>>, vector<128x128xbf16>
    %cst_8 = arith.constant dense<0.000000e+00> : vector<8x128xf32>
    %12 = tpu.matmul %10, %11, %cst_8 {dimension_numbers = #tpu.dot_dimension_numbers<[1], [0], [0], [1], [0, 0, 1, 1], [], []>} : vector<8x128xbf16>, vector<128x128xbf16>, vector<8x128xf32> -> vector<8x128xf32>
    %c0_9 = arith.constant 0 : index
    %c0_10 = arith.constant 0 : index
    %13 = vector.load %arg5[%c0_9, %c0_10] : memref<1x128xbf16, #tpu.memory_space<vmem>>, vector<1x128xbf16>
    %14 = arith.extf %13 : vector<1x128xbf16> to vector<1x128xf32>
    %15 = vector.broadcast %14 : vector<1x128xf32> to vector<8x128xf32>
    %16 = arith.addf %12, %15 : vector<8x128xf32>
    %cst_11 = arith.constant 0.000000e+00 : f32
    %17 = vector.broadcast %cst_11 : f32 to vector<8x128xf32>
    %18 = arith.maximumf %16, %17 : vector<8x128xf32>
    %19 = arith.truncf %18 : vector<8x128xf32> to vector<8x128xbf16>
    %c0_12 = arith.constant 0 : index
    %c0_13 = arith.constant 0 : index
    %20 = vector.load %arg6[%c0_12, %c0_13] : memref<128x8xbf16, #tpu.memory_space<vmem>>, vector<128x8xbf16>
    %cst_14 = arith.constant dense<0.000000e+00> : vector<8x8xf32>
    %21 = tpu.matmul %19, %20, %cst_14 {dimension_numbers = #tpu.dot_dimension_numbers<[1], [0], [0], [1], [0, 0, 1, 1], [], []>} : vector<8x128xbf16>, vector<128x8xbf16>, vector<8x8xf32> -> vector<8x8xf32>
    %c0_15 = arith.constant 0 : index
    %c0_16 = arith.constant 0 : index
    %22 = vector.load %arg7[%c0_15, %c0_16] : memref<1x8xbf16, #tpu.memory_space<vmem>>, vector<1x8xbf16>
    %23 = arith.extf %22 : vector<1x8xbf16> to vector<1x8xf32>
    %24 = vector.broadcast %23 : vector<1x8xf32> to vector<8x8xf32>
    %25 = arith.addf %21, %24 : vector<8x8xf32>
    %c0_17 = arith.constant 0 : index
    %c0_18 = arith.constant 0 : index
    %26 = vector.load %arg8[%c0_17, %c0_18] : memref<8x8xf32, #tpu.memory_space<vmem>>, vector<8x8xf32>
    tpu.vector_store %arg8[%c0_17, %c0_18], %25 {strides = array<i32>} : memref<8x8xf32, #tpu.memory_space<vmem>>, vector<8x8xf32>,
    return
  }
  func.func @transform_0(%arg0: i32) -> (i32, i32) {
    %c0_i32 = arith.constant 0 : i32
    %c0_i32_0 = arith.constant 0 : i32
    return %arg0, %c0_i32 : i32, i32
  }
  func.func @transform_1(%arg0: i32) -> (i32, i32) {
    %c0_i32 = arith.constant 0 : i32
    %c0_i32_0 = arith.constant 0 : i32
    %c0_i32_1 = arith.constant 0 : i32
    return %c0_i32, %c0_i32_0 : i32, i32
  }
  func.func @transform_2(%arg0: i32) -> (i32, i32) {
    %c0_i32 = arith.constant 0 : i32
    %c0_i32_0 = arith.constant 0 : i32
    %c0_i32_1 = arith.constant 0 : i32
    return %c0_i32, %c0_i32_0 : i32, i32
  }
  func.func @transform_3(%arg0: i32) -> (i32, i32) {
    %c0_i32 = arith.constant 0 : i32
    %c0_i32_0 = arith.constant 0 : i32
    %c0_i32_1 = arith.constant 0 : i32
    return %c0_i32, %c0_i32_0 : i32, i32
  }
  func.func @transform_4(%arg0: i32) -> (i32, i32) {
    %c0_i32 = arith.constant 0 : i32
    %c0_i32_0 = arith.constant 0 : i32
    %c0_i32_1 = arith.constant 0 : i32
    return %c0_i32, %c0_i32_0 : i32, i32
  }
  func.func @transform_5(%arg0: i32) -> (i32, i32) {
    %c0_i32 = arith.constant 0 : i32
    %c0_i32_0 = arith.constant 0 : i32
    %c0_i32_1 = arith.constant 0 : i32
    return %c0_i32, %c0_i32_0 : i32, i32
  }
  func.func @transform_6(%arg0: i32) -> (i32, i32) {
    %c0_i32 = arith.constant 0 : i32
    %c0_i32_0 = arith.constant 0 : i32
    %c0_i32_1 = arith.constant 0 : i32
    return %c0_i32, %c0_i32_0 : i32, i32
  }
  func.func @transform_7(%arg0: i32) -> (i32, i32) {
    %c0_i32 = arith.constant 0 : i32
    %c0_i32_0 = arith.constant 0 : i32
    return %arg0, %c0_i32 : i32, i32
  }
}

</mosaic_0001>

<llo_original>
// kernel: discrete_policy_forward.1
$region0: #{discrete_policy_forward.1}
  #allocation0 [shape = 'u32[]', space=smem, size = 0x4, offset = 0x4, fixed_abs, tag = 'smem constant byte address 0x4 - core index']
  #allocation1 [shape = 'u32[144,128]{1,0:T(1,128)}', space=vmem, size = 0x12000, scoped, tag = 'internal scratch']
  %s0 = inlined_call_operand.vmem [shape: f32[8,16], index: 0, kind: input, shape index: {}]
  %s1 = inlined_call_operand.vmem [shape: bf16[16,128], index: 1, kind: input, shape index: {}]
  %s2 = inlined_call_operand.vmem [shape: bf16[1,128], index: 2, kind: input, shape index: {}]
  %s3 = inlined_call_operand.vmem [shape: bf16[128,128], index: 3, kind: input, shape index: {}]
  %s4 = inlined_call_operand.vmem [shape: bf16[1,128], index: 4, kind: input, shape index: {}]
  %s5 = inlined_call_operand.vmem [shape: bf16[128,8], index: 5, kind: input, shape index: {}]
  %s6 = inlined_call_operand.vmem [shape: bf16[1,8], index: 6, kind: input, shape index: {}]
  %s7 = inlined_call_operand.vmem [shape: f32[8,8], index: 7, kind: output, shape index: {}]
  %s8 = sld [smem:[#allocation0]]
  $region38: #{discrete_policy_forward.1} parent=0
    _
  %s10 = ssub.s32 1, %s8
  %s11 = scalar_select 0, %s10, %s8
  // Predicated region
  $region2: #{discrete_policy_forward.1} parent=0 // pred_check
    _
  $region3: #{discrete_policy_forward.1} parent=0 // pred_check_branch
    %13 = sbr.rel (0) target = $region5
  $region4: #{discrete_policy_forward.1} parent=0 // pred_region
    _
  $region5: #{discrete_policy_forward.1} parent=0 // pred_fallthru
    _
  // Predicated region
  $region6: #{discrete_policy_forward.1} parent=0 // pred_check
    _
  $region7: #{discrete_policy_forward.1} parent=0 // pred_check_branch
    %15 = sbr.rel (0) target = $region9
  $region8: #{discrete_policy_forward.1} parent=0 // pred_region
    _
  $region9: #{discrete_policy_forward.1} parent=0 // pred_fallthru
    _
  // Predicated region
  $region10: #{discrete_policy_forward.1} parent=0 // pred_check
    _
  $region11: #{discrete_policy_forward.1} parent=0 // pred_check_branch
    %17 = sbr.rel (0) target = $region13
  $region12: #{discrete_policy_forward.1} parent=0 // pred_region
    _
  $region13: #{discrete_policy_forward.1} parent=0 // pred_fallthru
    _
  // Predicated region
  $region14: #{discrete_policy_forward.1} parent=0 // pred_check
    _
  $region15: #{discrete_policy_forward.1} parent=0 // pred_check_branch
    %19 = sbr.rel (0) target = $region17
  $region16: #{discrete_policy_forward.1} parent=0 // pred_region
    _
  $region17: #{discrete_policy_forward.1} parent=0 // pred_fallthru
    _
  // Predicated region
  $region18: #{discrete_policy_forward.1} parent=0 // pred_check
    _
  $region19: #{discrete_policy_forward.1} parent=0 // pred_check_branch
    %21 = sbr.rel (0) target = $region21
  $region20: #{discrete_policy_forward.1} parent=0 // pred_region
    _
  $region21: #{discrete_policy_forward.1} parent=0 // pred_fallthru
    _
  // Predicated region
  $region22: #{discrete_policy_forward.1} parent=0 // pred_check
    _
  $region23: #{discrete_policy_forward.1} parent=0 // pred_check_branch
    %23 = sbr.rel (0) target = $region25
  $region24: #{discrete_policy_forward.1} parent=0 // pred_region
    _
  $region25: #{discrete_policy_forward.1} parent=0 // pred_fallthru
    _
  // Predicated region
  $region26: #{discrete_policy_forward.1} parent=0 // pred_check
    _
  $region27: #{discrete_policy_forward.1} parent=0 // pred_check_branch
    %25 = sbr.rel (0) target = $region29
  $region28: #{discrete_policy_forward.1} parent=0 // pred_region
    _
  $region29: #{discrete_policy_forward.1} parent=0 // pred_fallthru
    _
  %v27 = vld [vmem:[%s0] sm:$0xff]
  %v28 = vpack.c.bf16 %v27, %v27
  %v29 = vld [vmem:[%s1] sm:$0xf]
  %v30 = vld [vmem:[%s1 + $0x4] sm:$0xf]
  %v31 = vld [vmem:[%s2] sm:$0x1]
  %v32 = vunpack.c.l.bf16 %v31
  %v33 = vlaneseq
  %v34 = vshrl.u32 %v33, 7
  %v35 = vsub.s32 0, %v34
  %v36 = vrot.slane %v32, %v35
  %v39 = vunpack.c.l.b16 %v29
  %v40 = vunpack.c.l.b16 %v30
  %v41 = vpack.c.b16 %v40, %v39
  %vm43 = vcmask 130048
  %v45 = vsel %vm43, %v28, 0
  %47 = vmatprep.subr.bf16.mxu0 0
  %48 = vmatpush1.bf16.msra.mxu0 %v41
  %49 = vmatprep.subr.bf16.mxu0 0
  %50 = vmatpush1.bf16.msra.mxu0 0
  %51 = vmatprep.subr.bf16.mxu0 0
  %52 = vmatpush1.bf16.msra.mxu0 0
  %53 = vmatprep.subr.bf16.mxu0 0
  %54 = vmatpush1.bf16.msra.mxu0 0
  %55 = vmatprep.subr.bf16.mxu0 0
  %56 = vmatpush1.bf16.msra.mxu0 0
  %57 = vmatprep.subr.bf16.mxu0 0
  %58 = vmatpush1.bf16.msra.mxu0 0
  %59 = vmatprep.subr.bf16.mxu0 0
  %60 = vmatpush1.bf16.msra.mxu0 0
  %61 = vmatprep.subr.bf16.mxu0 0
  %62 = vmatpush1.bf16.msra.mxu0 0
  %63 = vmatprep.subr.bf16.mxu0 0
  %64 = vmatpush1.bf16.msra.mxu0 0
  %65 = vmatprep.subr.bf16.mxu0 0
  %66 = vmatpush1.bf16.msra.mxu0 0
  %67 = vmatprep.subr.bf16.mxu0 0
  %68 = vmatpush1.bf16.msra.mxu0 0
  %69 = vmatprep.subr.bf16.mxu0 0
  %70 = vmatpush1.bf16.msra.mxu0 0
  %71 = vmatprep.subr.bf16.mxu0 0
  %72 = vmatpush1.bf16.msra.mxu0 0
  %73 = vmatprep.subr.bf16.mxu0 0
  %74 = vmatpush1.bf16.msra.mxu0 0
  %75 = vmatprep.subr.bf16.mxu0 0
  %76 = vmatpush1.bf16.msra.mxu0 0
  %77 = vmatprep.subr.bf16.mxu0 0
  %78 = vmatpush1.bf16.msra.mxu0 0
  %79 = vmatprep.mubr.bf16.mxu0 0
  %80 = vmatmul.mubr.bf16.gmra.mrb[0].mxu0 %v45
  %v81 = vpop.f32.mrb[0].mxu0
  %v82 = vadd.f32 %v36, %v81
  %v83 = vpop.f32.mrb[0].mxu0
  %v84 = vpop.f32.mrb[0].mxu0
  %v85 = vpop.f32.mrb[0].mxu0
  %86 = vdwg.mxu0
  %v87 = vmax.f32 %v82, 0.0
  %v88 = vpack.c.bf16 %v87, %v87
  %v89 = vld [vmem:[%s3] sm:$0xf]
  %v90 = vld [vmem:[%s3 + $0x4] sm:$0xf]
  %v91 = vld [vmem:[%s3 + $0x8] sm:$0xf]
  %v92 = vld [vmem:[%s3 + $0xc] sm:$0xf]
  %v93 = vld [vmem:[%s3 + $0x10] sm:$0xf]
  %v94 = vld [vmem:[%s3 + $0x14] sm:$0xf]
  %v95 = vld [vmem:[%s3 + $0x18] sm:$0xf]
  %v96 = vld [vmem:[%s3 + $0x1c] sm:$0xf]
  %v97 = vld [vmem:[%s3 + $0x20] sm:$0xf]
  %v98 = vld [vmem:[%s3 + $0x24] sm:$0xf]
  %v99 = vld [vmem:[%s3 + $0x28] sm:$0xf]
  %v100 = vld [vmem:[%s3 + $0x2c] sm:$0xf]
  %v101 = vld [vmem:[%s3 + $0x30] sm:$0xf]
  %v102 = vld [vmem:[%s3 + $0x34] sm:$0xf]
  %v103 = vld [vmem:[%s3 + $0x38] sm:$0xf]
  %v104 = vld [vmem:[%s3 + $0x3c] sm:$0xf]
  %v105 = vld [vmem:[%s4] sm:$0x1]
  %v106 = vunpack.c.l.bf16 %v105
  %v107 = vlaneseq
  %v108 = vshrl.u32 %v107, 7
  %v109 = vsub.s32 0, %v108
  %v110 = vrot.slane %v106, %v109
  %v127 = vunpack.c.l.b16 %v89
  %v128 = vunpack.c.l.b16 %v90
  %v129 = vunpack.c.l.b16 %v91
  %v130 = vunpack.c.l.b16 %v92
  %v131 = vunpack.c.l.b16 %v93
  %v132 = vunpack.c.l.b16 %v94
  %v133 = vunpack.c.l.b16 %v95
  %v134 = vunpack.c.l.b16 %v96
  %v135 = vunpack.c.l.b16 %v97
  %v136 = vunpack.c.l.b16 %v98
  %v137 = vunpack.c.l.b16 %v99
  %v138 = vunpack.c.l.b16 %v100
  %v139 = vunpack.c.l.b16 %v101
  %v140 = vunpack.c.l.b16 %v102
  %v141 = vunpack.c.l.b16 %v103
  %v142 = vunpack.c.l.b16 %v104
  %v143 = vpack.c.b16 %v128, %v127
  %v144 = vpack.c.b16 %v130, %v129
  %v145 = vpack.c.b16 %v132, %v131
  %v146 = vpack.c.b16 %v134, %v133
  %v147 = vpack.c.b16 %v136, %v135
  %v148 = vpack.c.b16 %v138, %v137
  %v149 = vpack.c.b16 %v140, %v139
  %v150 = vpack.c.b16 %v142, %v141
  %159 = vmatprep.subr.bf16.mxu0 0
  %160 = vmatpush1.bf16.msra.mxu0 %v143
  %161 = vmatprep.subr.bf16.mxu0 0
  %162 = vmatpush1.bf16.msra.mxu0 %v144
  %163 = vmatprep.subr.bf16.mxu0 0
  %164 = vmatpush1.bf16.msra.mxu0 %v145
  %165 = vmatprep.subr.bf16.mxu0 0
  %166 = vmatpush1.bf16.msra.mxu0 %v146
  %167 = vmatprep.subr.bf16.mxu0 0
  %168 = vmatpush1.bf16.msra.mxu0 %v147
  %169 = vmatprep.subr.bf16.mxu0 0
  %170 = vmatpush1.bf16.msra.mxu0 %v148
  %171 = vmatprep.subr.bf16.mxu0 0
  %172 = vmatpush1.bf16.msra.mxu0 %v149
  %173 = vmatprep.subr.bf16.mxu0 0
  %174 = vmatpush1.bf16.msra.mxu0 %v150
  %175 = vmatprep.subr.bf16.mxu0 0
  %176 = vmatpush1.bf16.msra.mxu0 0
  %177 = vmatprep.subr.bf16.mxu0 0
  %178 = vmatpush1.bf16.msra.mxu0 0
  %179 = vmatprep.subr.bf16.mxu0 0
  %180 = vmatpush1.bf16.msra.mxu0 0
  %181 = vmatprep.subr.bf16.mxu0 0
  %182 = vmatpush1.bf16.msra.mxu0 0
  %183 = vmatprep.subr.bf16.mxu0 0
  %184 = vmatpush1.bf16.msra.mxu0 0
  %185 = vmatprep.subr.bf16.mxu0 0
  %186 = vmatpush1.bf16.msra.mxu0 0
  %187 = vmatprep.subr.bf16.mxu0 0
  %188 = vmatpush1.bf16.msra.mxu0 0
  %189 = vmatprep.subr.bf16.mxu0 0
  %190 = vmatpush1.bf16.msra.mxu0 0
  %191 = vmatprep.mubr.bf16.mxu0 0
  %192 = vmatmul.mubr.bf16.gmra.mrb[0].mxu0 %v88
  %v193 = vpop.f32.mrb[0].mxu0
  %v194 = vadd.f32 %v110, %v193
  %v195 = vpop.f32.mrb[0].mxu0
  %v196 = vpop.f32.mrb[0].mxu0
  %v197 = vpop.f32.mrb[0].mxu0
  %198 = vdwg.mxu0
  %v199 = vmax.f32 %v194, 0.0
  %v200 = vpack.c.bf16 %v199, %v199
  %v201 = vld [vmem:[%s5] sm:$0xf]
  %v202 = vld [vmem:[%s5 + $0x4] sm:$0xf]
  %v203 = vld [vmem:[%s5 + $0x8] sm:$0xf]
  %v204 = vld [vmem:[%s5 + $0xc] sm:$0xf]
  %v205 = vld [vmem:[%s5 + $0x10] sm:$0xf]
  %v206 = vld [vmem:[%s5 + $0x14] sm:$0xf]
  %v207 = vld [vmem:[%s5 + $0x18] sm:$0xf]
  %v208 = vld [vmem:[%s5 + $0x1c] sm:$0xf]
  %v209 = vld [vmem:[%s5 + $0x20] sm:$0xf]
  %v210 = vld [vmem:[%s5 + $0x24] sm:$0xf]
  %v211 = vld [vmem:[%s5 + $0x28] sm:$0xf]
  %v212 = vld [vmem:[%s5 + $0x2c] sm:$0xf]
  %v213 = vld [vmem:[%s5 + $0x30] sm:$0xf]
  %v214 = vld [vmem:[%s5 + $0x34] sm:$0xf]
  %v215 = vld [vmem:[%s5 + $0x38] sm:$0xf]
  %v216 = vld [vmem:[%s5 + $0x3c] sm:$0xf]
  %v217 = vld [vmem:[%s6] sm:$0x1]
  %v218 = vunpack.c.l.bf16 %v217
  %v219 = vlaneseq
  %v220 = vshrl.u32 %v219, 7
  %v221 = vsub.s32 0, %v220
  %v222 = vrot.slane %v218, %v221
  %v239 = vunpack.c.l.b16 %v201
  %v240 = vunpack.c.l.b16 %v202
  %v241 = vunpack.c.l.b16 %v203
  %v242 = vunpack.c.l.b16 %v204
  %v243 = vunpack.c.l.b16 %v205
  %v244 = vunpack.c.l.b16 %v206
  %v245 = vunpack.c.l.b16 %v207
  %v246 = vunpack.c.l.b16 %v208
  %v247 = vunpack.c.l.b16 %v209
  %v248 = vunpack.c.l.b16 %v210
  %v249 = vunpack.c.l.b16 %v211
  %v250 = vunpack.c.l.b16 %v212
  %v251 = vunpack.c.l.b16 %v213
  %v252 = vunpack.c.l.b16 %v214
  %v253 = vunpack.c.l.b16 %v215
  %v254 = vunpack.c.l.b16 %v216
  %v255 = vpack.c.b16 %v240, %v239
  %v256 = vpack.c.b16 %v242, %v241
  %v257 = vpack.c.b16 %v244, %v243
  %v258 = vpack.c.b16 %v246, %v245
  %v259 = vpack.c.b16 %v248, %v247
  %v260 = vpack.c.b16 %v250, %v249
  %v261 = vpack.c.b16 %v252, %v251
  %v262 = vpack.c.b16 %v254, %v253
  %271 = vmatprep.subr.bf16.mxu0 0
  %272 = vmatpush1.bf16.msra.mxu0 %v255
  %273 = vmatprep.subr.bf16.mxu0 0
  %274 = vmatpush1.bf16.msra.mxu0 %v256
  %275 = vmatprep.subr.bf16.mxu0 0
  %276 = vmatpush1.bf16.msra.mxu0 %v257
  %277 = vmatprep.subr.bf16.mxu0 0
  %278 = vmatpush1.bf16.msra.mxu0 %v258
  %279 = vmatprep.subr.bf16.mxu0 0
  %280 = vmatpush1.bf16.msra.mxu0 %v259
  %281 = vmatprep.subr.bf16.mxu0 0
  %282 = vmatpush1.bf16.msra.mxu0 %v260
  %283 = vmatprep.subr.bf16.mxu0 0
  %284 = vmatpush1.bf16.msra.mxu0 %v261
  %285 = vmatprep.subr.bf16.mxu0 0
  %286 = vmatpush1.bf16.msra.mxu0 %v262
  %287 = vmatprep.subr.bf16.mxu0 0
  %288 = vmatpush1.bf16.msra.mxu0 0
  %289 = vmatprep.subr.bf16.mxu0 0
  %290 = vmatpush1.bf16.msra.mxu0 0
  %291 = vmatprep.subr.bf16.mxu0 0
  %292 = vmatpush1.bf16.msra.mxu0 0
  %293 = vmatprep.subr.bf16.mxu0 0
  %294 = vmatpush1.bf16.msra.mxu0 0
  %295 = vmatprep.subr.bf16.mxu0 0
  %296 = vmatpush1.bf16.msra.mxu0 0
  %297 = vmatprep.subr.bf16.mxu0 0
  %298 = vmatpush1.bf16.msra.mxu0 0
  %299 = vmatprep.subr.bf16.mxu0 0
  %300 = vmatpush1.bf16.msra.mxu0 0
  %301 = vmatprep.subr.bf16.mxu0 0
  %302 = vmatpush1.bf16.msra.mxu0 0
  %303 = vmatprep.mubr.bf16.mxu0 0
  %304 = vmatmul.mubr.bf16.gmra.mrb[0].mxu0 %v200
  %v305 = vpop.f32.mrb[0].mxu0
  %v306 = vadd.f32 %v222, %v305
  %v307 = vpop.f32.mrb[0].mxu0
  %v308 = vpop.f32.mrb[0].mxu0
  %v309 = vpop.f32.mrb[0].mxu0
  %310 = vdwg.mxu0
  %vm311 = vcmask 64512
  %312 = vst.msk [vmem:[%s7] sm:$0xff] %vm311, %v306
  // Predicated region
  $region30: #{discrete_policy_forward.1} parent=0 // pred_check
    _
  $region31: #{discrete_policy_forward.1} parent=0 // pred_check_branch
    %314 = sbr.rel (0) target = $region33
  $region32: #{discrete_policy_forward.1} parent=0 // pred_region
    _
  $region33: #{discrete_policy_forward.1} parent=0 // pred_fallthru
    _
  // Predicated region
  $region34: #{discrete_policy_forward.1} parent=0 // pred_check
    _
  $region35: #{discrete_policy_forward.1} parent=0 // pred_check_branch
    %316 = sbr.rel (0) target = $region37
  $region36: #{discrete_policy_forward.1} parent=0 // pred_region
    _
  $region37: #{discrete_policy_forward.1} parent=0 // pred_fallthru
    _

</llo_original>
